<compile_context>
chip_gen: v5e
topology: v5e:2x2
jax: 0.10.0
libtpu: 0.0.40
codegen_flags: <defaults>
</compile_context>

<pallas_src>
from functools import partial

import jax
import jax.numpy as jnp
from jax.experimental import pallas as pl
from jax.experimental.pallas import tpu as pltpu

_LANES = 128
_SUBLANES = 8


def _noise_amount_kernel(x_ref, o_ref, *, low, high, n_valid):
    # x_ref: (R, 128) float32 in VMEM, padded with `low` past the first
    #        n_valid (flattened) elements so padding contributes exactly 0.
    # o_ref: (1, 1) float32 in SMEM (scalar result).
    x = x_ref[...]
    inv_range = 1.0 / (high - low)
    scaled = (x - low) * inv_range
    o_ref[0, 0] = jnp.sum(scaled) * (1.0 / n_valid)


def noise_amount_forward(radiuses, low, high):
    """JAX/Pallas equivalent of NoiseAmount(low, high).forward(radiuses).

    radiuses: float array of any shape (typically (num_of_dots,)).
    Returns a scalar float32: mean((radiuses - low) / (high - low)).
    """
    r = jnp.asarray(radiuses, jnp.float32).reshape(-1)
    n = int(r.shape[0])
    assert n > 0

    # Pad to a whole number of (8, 128) vreg tiles and lay out lane-dense.
    tile = _SUBLANES * _LANES
    padded = pl.cdiv(n, tile) * tile
    r_pad = jnp.pad(r, (0, padded - n), constant_values=float(low))
    r2d = r_pad.reshape(padded // _LANES, _LANES)

    kernel = partial(_noise_amount_kernel,
                     low=float(low), high=float(high), n_valid=float(n))

    out = pl.pallas_call(
        kernel,
        out_shape=jax.ShapeDtypeStruct((1, 1), jnp.float32),
        in_specs=[pl.BlockSpec(memory_space=pltpu.MemorySpace.VMEM)],
        out_specs=pl.BlockSpec(memory_space=pltpu.MemorySpace.SMEM),
    )(r2d)
    return out[0, 0]


if __name__ == "__main__":
    # Deterministic small example consistent with how the module is used:
    # radiuses of a handful of dots, low/high matching the init range.
    num_of_dots = 16
    low, high = 0.04, 0.09

    key = jax.random.PRNGKey(0)
    radiuses = jax.random.uniform(key, (num_of_dots,), jnp.float32,
                                  minval=low, maxval=high)

    noise = noise_amount_forward(radiuses, low, high)
    noise = jax.block_until_ready(noise)

    # Pure-JAX reference check.
    ref = jnp.mean((radiuses - low) / (high - low))
    assert noise.shape == ()
    assert bool(jnp.allclose(noise, ref, rtol=1e-6, atol=1e-6)), (noise, ref)
    print("KERNEL_OK")
</pallas_src>

<mosaic_0001>
module attributes {stable_mosaic.version = 11 : i64} {
  func.func @_noise_amount_kernel(%arg0: memref<8x128xf32, #tpu.memory_space<vmem>>, %arg1: memref<1x1xf32, #tpu.memory_space<smem>>) attributes {dimension_semantics = [], scalar_prefetch = 0 : i64, scratch_operands = 0 : i64, tpu.core_type = #tpu.core_type<tc>} {
    %c0 = arith.constant 0 : index
    %c0_0 = arith.constant 0 : index
    %0 = vector.load %arg0[%c0, %c0_0] : memref<8x128xf32, #tpu.memory_space<vmem>>, vector<8x128xf32>
    %cst = arith.constant 4.000000e-02 : f32
    %1 = vector.broadcast %cst : f32 to vector<8x128xf32>
    %2 = arith.subf %0, %1 : vector<8x128xf32>
    %cst_1 = arith.constant 2.000000e+01 : f32
    %3 = vector.broadcast %cst_1 : f32 to vector<8x128xf32>
    %4 = arith.mulf %2, %3 : vector<8x128xf32>
    %5 = vector.shape_cast %4 : vector<8x128xf32> to vector<1x8x128xf32>
    %cst_2 = arith.constant dense<0.000000e+00> : vector<1xf32>
    %6 = vector.multi_reduction <add>, %5, %cst_2 [1, 2] : vector<1x8x128xf32> to vector<1xf32>
    %7 = vector.shape_cast %6 : vector<1xf32> to vector<1x1x1xf32>
    %8 = vector.extract %7[0, 0, 0] : f32 from vector<1x1x1xf32>
    %cst_3 = arith.constant 6.250000e-02 : f32
    %9 = arith.mulf %8, %cst_3 : f32
    %c0_4 = arith.constant 0 : index
    %c0_5 = arith.constant 0 : index
    %10 = memref.load %arg1[%c0_4, %c0_5] : memref<1x1xf32, #tpu.memory_space<smem>>
    memref.store %9, %arg1[%c0_4, %c0_5] : memref<1x1xf32, #tpu.memory_space<smem>>
    return
  }
}

</mosaic_0001>

<llo_original>
// kernel: tpu_custom_call.1
$region0: #{tpu_custom_call.1}
  #allocation0 [shape = 'u32[]', space=smem, size = 0x4, offset = 0x4, fixed_abs, tag = 'smem constant byte address 0x4 - core index']
  #allocation1 [shape = 'u32[72,128]{1,0:T(1,128)}', space=vmem, size = 0x9000, scoped, tag = 'internal scratch']
  %s0 = inlined_call_operand.hbm [shape: f32[8,128], index: 0, kind: input, shape index: {}]
  %s1 = inlined_call_operand.hbm [shape: f32[1,1], index: 1, kind: output, shape index: {}]
  %s2 = sld [smem:[#allocation0]]
  $region18: #{tpu_custom_call.1} parent=0
    _
  %s4 = ssub.s32 1, %s2
  %s5 = scalar_select 0, %s4, %s2
  $region1: #{tpu_custom_call.1} parent=0
    #allocation2 [shape = 'u8[4096]{0}', space=vmem, size = 0x1000, scoped, tag = 'input window, operand 0, single buffered']
    #allocation3 [shape = 's32[1]{0}', space=sflag, size = 0x4, scoped, tag = 'scoped memory for tpu_custom_call.1']
    #allocation4 [shape = 's32[1]{0}', space=sflag, size = 0x4, scoped, tag = 'scoped memory for tpu_custom_call.1']
    #allocation5 [shape = 'u8[512]{0}', space=smem, size = 0x200, scoped, tag = 'output window, operand 0, single buffered']
    %6 = vsyncpa [#allocation3], 0
    %7 = vsyncpa [#allocation4], 0
    // Predicated region
    $region2: #{tpu_custom_call.1} parent=1 // pred_check
      _
    $region3: #{tpu_custom_call.1} parent=1 // pred_check_branch
      %9 = sbr.rel (0) target = $region5
    $region4: #{tpu_custom_call.1} parent=1 // pred_region
      %11 = vsyncadd [#allocation3], 0
      %s13 = sshll.u32 %s0, 4
      %s14 = int_to_ptr.hbm [resolvable:$true] %s13
      %s15 = sshll.u32 [#allocation2], 4
      %s16 = int_to_ptr.vmem [resolvable:$true] %s15
      %18 = dma.hbm_to_vmem [thread:$0]  %s14, 128, %s16, [#allocation3]
    $region5: #{tpu_custom_call.1} parent=1 // pred_fallthru
      _
    // Predicated region
    $region6: #{tpu_custom_call.1} parent=1 // pred_check
      _
    $region7: #{tpu_custom_call.1} parent=1 // pred_check_branch
      %20 = sbr.rel (0) target = $region9
    $region8: #{tpu_custom_call.1} parent=1 // pred_region
      %22 = dma.done [#allocation3], 128
    $region9: #{tpu_custom_call.1} parent=1 // pred_fallthru
      _
    %v23 = vld [vmem:[#allocation2] sm:$0xff]
    %v24 = vsub.f32 %v23, 0.04
    %v25 = vmul.f32 %v24, 20.0
    %26 = vadd.xlane.f32.xlu0 %v25
    %v27 = vpop.xlane.xlu0 %26
    %v28 = vrot.slane %v27, 4
    %v29 = vadd.f32 %v27, %v28
    %v30 = vrot.slane %v29, 2
    %v31 = vadd.f32 %v29, %v30
    %v32 = vrot.slane %v31, 1
    %v33 = vadd.f32 %v31, %v32
    %s34 = vtos %v33
    %s35 = smul.f32 %s34, 0.0625
    %s36 = scalar_lea.smem [#allocation5], 0
    %37 = sst [smem:[%s36]] %s35
    // Predicated region
    $region10: #{tpu_custom_call.1} parent=1 // pred_check
      _
    $region11: #{tpu_custom_call.1} parent=1 // pred_check_branch
      %39 = sbr.rel (0) target = $region13
    $region12: #{tpu_custom_call.1} parent=1 // pred_region
      %41 = vsyncadd [#allocation4], 0
      %s43 = sshll.u32 %s1, 4
      %s44 = int_to_ptr.hbm [resolvable:$true] %s43
      %46 = dma.smem_to_hbm [#allocation5], 16, %s44, [#allocation4]
    $region13: #{tpu_custom_call.1} parent=1 // pred_fallthru
      _
    // Predicated region
    $region14: #{tpu_custom_call.1} parent=1 // pred_check
      _
    $region15: #{tpu_custom_call.1} parent=1 // pred_check_branch
      %48 = sbr.rel (0) target = $region17
    $region16: #{tpu_custom_call.1} parent=1 // pred_region
      %50 = dma.done [#allocation4], 16
    $region17: #{tpu_custom_call.1} parent=1 // pred_fallthru
      _
    %51 = sfence
    %52 = vsyncpa [#allocation3], 1
    %53 = vsyncpa [#allocation4], 1

</llo_original>
